<compile_context>
chip_gen: v7x
topology: tpu7x:2x2x1
jax: 0.10.0
libtpu: 0.0.40
codegen_flags: <defaults>
</compile_context>

<pallas_src>
import functools

import jax
import jax.numpy as jnp
from jax.experimental import pallas as pl
from jax.experimental.pallas import tpu as pltpu

BN_EPS = 1e-5
LANE = 128


def _round_up(v, m):
    return ((v + m - 1) // m) * m


def _pad_last(a, target, value=0.0):
    pad = target - a.shape[-1]
    if pad <= 0:
        return a
    return jnp.pad(a, [(0, 0)] * (a.ndim - 1) + [(0, pad)],
                   constant_values=value)


def _fused_ffn_kernel(*refs, n_layers):
    """refs = (alpha_smem, x_tile, [w, b] * n_layers, out_tile)."""
    alpha_ref = refs[0]
    x_ref = refs[1]
    o_ref = refs[-1]
    wb = refs[2:-1]

    alpha = alpha_ref[0]          # shared PReLU slope, scalar read from SMEM
    y = x_ref[...]                # (tile_n, in_pad) bf16 row tile

    for layer in range(n_layers):
        w_ref = wb[2 * layer]
        b_ref = wb[2 * layer + 1]
        # MXU: bf16 x bf16 operands, f32 accumulation.
        y = jnp.dot(y.astype(jnp.bfloat16), w_ref[...],
                    preferred_element_type=jnp.float32)
        y = y + b_ref[...]                       # (1, out_pad) f32 broadcast
        if layer < n_layers - 1:
            # PReLU (single shared parameter). BN already folded into W/b.
            y = jnp.where(y >= 0.0, y, alpha * y)
            # Dropout: identity (inference).
    o_ref[...] = y.astype(o_ref.dtype)


def feedforward_net(x, params, *, batch_norm=True, tile_n=512):
    """Fused forward pass. x: (N, in_units) f32 -> (N, out_units) f32."""
    n_layers = params["n_layers"]
    lins = params["lins"]
    bns = params["bns"]
    alpha = params["alpha"]                      # (1,) f32
    use_bn = bool(batch_norm) and n_layers > 1

    n, in_feat = x.shape
    assert tile_n % 8 == 0
    tile_rows = n if n <= tile_n else tile_n     # full dim or multiple of 8

    in_pad = _round_up(in_feat, LANE)
    x_p = _pad_last(x, in_pad).astype(jnp.bfloat16)

    kernel_inputs = [alpha, x_p]
    in_specs = [
        pl.BlockSpec(memory_space=pltpu.MemorySpace.SMEM),     # alpha (scalar)
        pl.BlockSpec((tile_rows, in_pad), lambda i: (i, 0)),   # row tile of x
    ]

    cur_pad = in_pad
    for li, (w, b) in enumerate(lins):
        fan_in, fan_out = w.shape
        out_pad = _round_up(fan_out, LANE)

        w_f, b_f = w, b
        if li < n_layers - 1 and use_bn:
            # Fold inference-mode BN (affine per-feature) into W and b.
            gamma, beta, rmean, rvar = bns[li]
            scale = gamma / jnp.sqrt(rvar + BN_EPS)   # (1, fan_out)
            shift = beta - rmean * scale
            w_f = w * scale
            b_f = b * scale + shift

        w_p = jnp.zeros((cur_pad, out_pad), jnp.float32)
        w_p = w_p.at[:fan_in, :fan_out].set(w_f).astype(jnp.bfloat16)
        b_p = _pad_last(b_f, out_pad)
        kernel_inputs += [w_p, b_p]
        in_specs += [
            pl.BlockSpec((cur_pad, out_pad), lambda i: (0, 0)),  # resident W
            pl.BlockSpec((1, out_pad), lambda i: (0, 0)),        # resident b
        ]
        cur_pad = out_pad

    out_units = lins[-1][0].shape[1]

    kernel = functools.partial(_fused_ffn_kernel, n_layers=n_layers)
    out_padded = pl.pallas_call(
        kernel,
        out_shape=jax.ShapeDtypeStruct((n, cur_pad), jnp.float32),
        grid=(pl.cdiv(n, tile_rows),),
        in_specs=in_specs,
        out_specs=pl.BlockSpec((tile_rows, cur_pad), lambda i: (i, 0)),
        compiler_params=pltpu.CompilerParams(
            dimension_semantics=("parallel",),
            vmem_limit_bytes=64 * 1024 * 1024),
    )(*kernel_inputs)
    return out_padded[:, :out_units]


def init_feedforward_params(key, in_units, out_units, hidden_channels,
                            n_layers):
    """Mirrors reset_parameters(): xavier_uniform(gain=relu) weights (stored as
    (in, out) = W.T), zero biases, BN gamma=1 / beta=0 / running stats 0 & 1,
    shared PReLU alpha = 0.25."""
    n_layers = max(1, n_layers)
    gain = 2.0 ** 0.5  # calculate_gain('relu')
    if n_layers == 1:
        dims = [(in_units, out_units)]
    else:
        dims = ([(in_units, hidden_channels)]
                + [(hidden_channels, hidden_channels)] * (n_layers - 2)
                + [(hidden_channels, out_units)])

    lins, bns = [], []
    for fan_in, fan_out in dims:
        key, sub = jax.random.split(key)
        bound = gain * (6.0 / (fan_in + fan_out)) ** 0.5
        w = jax.random.uniform(sub, (fan_in, fan_out), jnp.float32,
                               -bound, bound)
        lins.append((w, jnp.zeros((1, fan_out), jnp.float32)))
    for i in range(n_layers - 1):
        f = dims[i][1]
        bns.append((jnp.ones((1, f), jnp.float32),    # gamma
                    jnp.zeros((1, f), jnp.float32),   # beta
                    jnp.zeros((1, f), jnp.float32),   # running_mean
                    jnp.ones((1, f), jnp.float32)))   # running_var
    alpha = jnp.full((1,), 0.25, jnp.float32)
    return {"lins": lins, "bns": bns, "alpha": alpha, "n_layers": n_layers}


def feedforward_net_ref(x, params, *, batch_norm=True):
    """Pure-JAX reference with matching numerics (bf16 matmul, f32 elementwise,
    eval-mode BatchNorm, dropout = identity)."""
    n_layers = params["n_layers"]
    alpha = params["alpha"][0]
    for i, (w, b) in enumerate(params["lins"]):
        x = jnp.dot(x.astype(jnp.bfloat16), w.astype(jnp.bfloat16),
                    preferred_element_type=jnp.float32) + b
        if i < n_layers - 1:
            if batch_norm:
                gamma, beta, rmean, rvar = params["bns"][i]
                x = (x - rmean) / jnp.sqrt(rvar + BN_EPS) * gamma + beta
            x = jnp.where(x >= 0, x, alpha * x)
    return x


if __name__ == "__main__":
    key = jax.random.PRNGKey(0)
    k_x, k_p = jax.random.split(key)

    N, IN, HID, OUT, LAYERS = 64, 64, 128, 16, 3
    x = jax.random.normal(k_x, (N, IN), jnp.float32)
    params = init_feedforward_params(k_p, IN, OUT, HID, LAYERS)

    # Single-tile path, batch_norm=True.
    out = jax.block_until_ready(feedforward_net(x, params, batch_norm=True))
    assert out.shape == (N, OUT)
    ref = feedforward_net_ref(x, params, batch_norm=True)
    assert jnp.allclose(out, ref, atol=1e-2, rtol=1e-2), (
        f"batch_norm=True mismatch (max abs err {jnp.max(jnp.abs(out - ref))})")

    # batch_norm=False path.
    out_nb = jax.block_until_ready(feedforward_net(x, params, batch_norm=False))
    ref_nb = feedforward_net_ref(x, params, batch_norm=False)
    assert jnp.allclose(out_nb, ref_nb, atol=1e-2, rtol=1e-2), (
        f"batch_norm=False mismatch (max abs err {jnp.max(jnp.abs(out_nb - ref_nb))})")

    # Multi-tile grid path (4 row tiles).
    out_mt = jax.block_until_ready(
        feedforward_net(x, params, batch_norm=True, tile_n=16))
    assert jnp.allclose(out_mt, ref, atol=1e-2, rtol=1e-2), (
        f"multi-tile mismatch (max abs err {jnp.max(jnp.abs(out_mt - ref))})")

    print("KERNEL_OK")
</pallas_src>

<mosaic_0001>
module attributes {stable_mosaic.version = 11 : i64} {
  func.func @_fused_ffn_kernel(%arg0: i32, %arg1: memref<1xf32, #tpu.memory_space<smem>>, %arg2: memref<64x128xbf16, #tpu.memory_space<vmem>>, %arg3: memref<128x128xbf16, #tpu.memory_space<vmem>>, %arg4: memref<1x128xf32, #tpu.memory_space<vmem>>, %arg5: memref<128x128xbf16, #tpu.memory_space<vmem>>, %arg6: memref<1x128xf32, #tpu.memory_space<vmem>>, %arg7: memref<128x128xbf16, #tpu.memory_space<vmem>>, %arg8: memref<1x128xf32, #tpu.memory_space<vmem>>, %arg9: memref<64x128xf32, #tpu.memory_space<vmem>>) attributes {dimension_semantics = [#tpu.dimension_semantics<parallel>], iteration_bounds = array<i64: 1>, scalar_prefetch = 0 : i64, scratch_operands = 0 : i64, tpu.core_type = #tpu.core_type<tc>, window_params = [{transform_indices = @transform_0, window_bounds = array<i64: 1>}, {transform_indices = @transform_1, window_bounds = array<i64: 64, 128>}, {pipeline_mode = #tpu.pipeline_mode<synchronous>, transform_indices = @transform_2, window_bounds = array<i64: 128, 128>}, {pipeline_mode = #tpu.pipeline_mode<synchronous>, transform_indices = @transform_3, window_bounds = array<i64: 1, 128>}, {pipeline_mode = #tpu.pipeline_mode<synchronous>, transform_indices = @transform_4, window_bounds = array<i64: 128, 128>}, {pipeline_mode = #tpu.pipeline_mode<synchronous>, transform_indices = @transform_5, window_bounds = array<i64: 1, 128>}, {pipeline_mode = #tpu.pipeline_mode<synchronous>, transform_indices = @transform_6, window_bounds = array<i64: 128, 128>}, {pipeline_mode = #tpu.pipeline_mode<synchronous>, transform_indices = @transform_7, window_bounds = array<i64: 1, 128>}, {transform_indices = @transform_8, window_bounds = array<i64: 64, 128>}]} {
    %c0 = arith.constant 0 : index
    %0 = memref.load %arg1[%c0] : memref<1xf32, #tpu.memory_space<smem>>
    %c0_0 = arith.constant 0 : index
    %c0_1 = arith.constant 0 : index
    %1 = vector.load %arg2[%c0_0, %c0_1] : memref<64x128xbf16, #tpu.memory_space<vmem>>, vector<64x128xbf16>
    %c0_2 = arith.constant 0 : index
    %c0_3 = arith.constant 0 : index
    %2 = vector.load %arg3[%c0_2, %c0_3] : memref<128x128xbf16, #tpu.memory_space<vmem>>, vector<128x128xbf16>
    %cst = arith.constant dense<0.000000e+00> : vector<64x128xf32>
    %3 = tpu.matmul %1, %2, %cst {dimension_numbers = #tpu.dot_dimension_numbers<[1], [0], [0], [1], [0, 0, 1, 1], [], []>} : vector<64x128xbf16>, vector<128x128xbf16>, vector<64x128xf32> -> vector<64x128xf32>
    %c0_4 = arith.constant 0 : index
    %c0_5 = arith.constant 0 : index
    %4 = vector.load %arg4[%c0_4, %c0_5] : memref<1x128xf32, #tpu.memory_space<vmem>>, vector<1x128xf32>
    %5 = vector.broadcast %4 : vector<1x128xf32> to vector<64x128xf32>
    %6 = arith.addf %3, %5 : vector<64x128xf32>
    %cst_6 = arith.constant 0.000000e+00 : f32
    %7 = vector.broadcast %cst_6 : f32 to vector<64x128xf32>
    %8 = arith.cmpf oge, %6, %7 : vector<64x128xf32>
    %9 = vector.broadcast %0 : f32 to vector<64x128xf32>
    %10 = arith.mulf %9, %6 : vector<64x128xf32>
    %11 = arith.select %8, %6, %10 : vector<64x128xi1>, vector<64x128xf32>
    %12 = arith.truncf %11 : vector<64x128xf32> to vector<64x128xbf16>
    %c0_7 = arith.constant 0 : index
    %c0_8 = arith.constant 0 : index
    %13 = vector.load %arg5[%c0_7, %c0_8] : memref<128x128xbf16, #tpu.memory_space<vmem>>, vector<128x128xbf16>
    %cst_9 = arith.constant dense<0.000000e+00> : vector<64x128xf32>
    %14 = tpu.matmul %12, %13, %cst_9 {dimension_numbers = #tpu.dot_dimension_numbers<[1], [0], [0], [1], [0, 0, 1, 1], [], []>} : vector<64x128xbf16>, vector<128x128xbf16>, vector<64x128xf32> -> vector<64x128xf32>
    %c0_10 = arith.constant 0 : index
    %c0_11 = arith.constant 0 : index
    %15 = vector.load %arg6[%c0_10, %c0_11] : memref<1x128xf32, #tpu.memory_space<vmem>>, vector<1x128xf32>
    %16 = vector.broadcast %15 : vector<1x128xf32> to vector<64x128xf32>
    %17 = arith.addf %14, %16 : vector<64x128xf32>
    %cst_12 = arith.constant 0.000000e+00 : f32
    %18 = vector.broadcast %cst_12 : f32 to vector<64x128xf32>
    %19 = arith.cmpf oge, %17, %18 : vector<64x128xf32>
    %20 = vector.broadcast %0 : f32 to vector<64x128xf32>
    %21 = arith.mulf %20, %17 : vector<64x128xf32>
    %22 = arith.select %19, %17, %21 : vector<64x128xi1>, vector<64x128xf32>
    %23 = arith.truncf %22 : vector<64x128xf32> to vector<64x128xbf16>
    %c0_13 = arith.constant 0 : index
    %c0_14 = arith.constant 0 : index
    %24 = vector.load %arg7[%c0_13, %c0_14] : memref<128x128xbf16, #tpu.memory_space<vmem>>, vector<128x128xbf16>
    %cst_15 = arith.constant dense<0.000000e+00> : vector<64x128xf32>
    %25 = tpu.matmul %23, %24, %cst_15 {dimension_numbers = #tpu.dot_dimension_numbers<[1], [0], [0], [1], [0, 0, 1, 1], [], []>} : vector<64x128xbf16>, vector<128x128xbf16>, vector<64x128xf32> -> vector<64x128xf32>
    %c0_16 = arith.constant 0 : index
    %c0_17 = arith.constant 0 : index
    %26 = vector.load %arg8[%c0_16, %c0_17] : memref<1x128xf32, #tpu.memory_space<vmem>>, vector<1x128xf32>
    %27 = vector.broadcast %26 : vector<1x128xf32> to vector<64x128xf32>
    %28 = arith.addf %25, %27 : vector<64x128xf32>
    %c0_18 = arith.constant 0 : index
    %c0_19 = arith.constant 0 : index
    %29 = vector.load %arg9[%c0_18, %c0_19] : memref<64x128xf32, #tpu.memory_space<vmem>>, vector<64x128xf32>
    tpu.vector_store %arg9[%c0_18, %c0_19], %28 {strides = array<i32>} : memref<64x128xf32, #tpu.memory_space<vmem>>, vector<64x128xf32>,
    return
  }
  func.func @transform_0(%arg0: i32) -> i32 {
    %c0_i32 = arith.constant 0 : i32
    %c0_i32_0 = arith.constant 0 : i32
    return %c0_i32 : i32
  }
  func.func @transform_1(%arg0: i32) -> (i32, i32) {
    %c0_i32 = arith.constant 0 : i32
    %c0_i32_0 = arith.constant 0 : i32
    return %arg0, %c0_i32 : i32, i32
  }
  func.func @transform_2(%arg0: i32) -> (i32, i32) {
    %c0_i32 = arith.constant 0 : i32
    %c0_i32_0 = arith.constant 0 : i32
    %c0_i32_1 = arith.constant 0 : i32
    return %c0_i32, %c0_i32_0 : i32, i32
  }
  func.func @transform_3(%arg0: i32) -> (i32, i32) {
    %c0_i32 = arith.constant 0 : i32
    %c0_i32_0 = arith.constant 0 : i32
    %c0_i32_1 = arith.constant 0 : i32
    return %c0_i32, %c0_i32_0 : i32, i32
  }
  func.func @transform_4(%arg0: i32) -> (i32, i32) {
    %c0_i32 = arith.constant 0 : i32
    %c0_i32_0 = arith.constant 0 : i32
    %c0_i32_1 = arith.constant 0 : i32
    return %c0_i32, %c0_i32_0 : i32, i32
  }
  func.func @transform_5(%arg0: i32) -> (i32, i32) {
    %c0_i32 = arith.constant 0 : i32
    %c0_i32_0 = arith.constant 0 : i32
    %c0_i32_1 = arith.constant 0 : i32
    return %c0_i32, %c0_i32_0 : i32, i32
  }
  func.func @transform_6(%arg0: i32) -> (i32, i32) {
    %c0_i32 = arith.constant 0 : i32
    %c0_i32_0 = arith.constant 0 : i32
    %c0_i32_1 = arith.constant 0 : i32
    return %c0_i32, %c0_i32_0 : i32, i32
  }
  func.func @transform_7(%arg0: i32) -> (i32, i32) {
    %c0_i32 = arith.constant 0 : i32
    %c0_i32_0 = arith.constant 0 : i32
    %c0_i32_1 = arith.constant 0 : i32
    return %c0_i32, %c0_i32_0 : i32, i32
  }
  func.func @transform_8(%arg0: i32) -> (i32, i32) {
    %c0_i32 = arith.constant 0 : i32
    %c0_i32_0 = arith.constant 0 : i32
    return %arg0, %c0_i32 : i32, i32
  }
}

</mosaic_0001>

<llo_original>
// kernel: tpu_custom_call.1
$region0: #{tpu_custom_call.1}
  #allocation0 [shape = 'u32[]', space=smem, size = 0x4, offset = 0x4, fixed_abs, tag = 'smem constant byte address 0x4 - core index']
  #allocation1 [shape = 'u32[144,128]{1,0:T(1,128)}', space=vmem, size = 0x12000, scoped, tag = 'internal scratch']
  #allocation2 [shape = 'f32[1]{0:T(128)S(6)}', space=smem, size = 0x200, scoped, tag = 'scoped memory for tpu_custom_call.1']
  %s0 = inlined_call_operand.<no memory space> [shape: f32[1], index: 0, kind: input, shape index: {}]
  %s1 = inlined_call_operand.hbm [shape: bf16[64,128], index: 1, kind: input, shape index: {}]
  %s2 = inlined_call_operand.hbm [shape: bf16[128,128], index: 2, kind: input, shape index: {}]
  %s3 = inlined_call_operand.hbm [shape: f32[1,128], index: 3, kind: input, shape index: {}]
  %s4 = inlined_call_operand.hbm [shape: bf16[128,128], index: 4, kind: input, shape index: {}]
  %s5 = inlined_call_operand.hbm [shape: f32[1,128], index: 5, kind: input, shape index: {}]
  %s6 = inlined_call_operand.hbm [shape: bf16[128,128], index: 6, kind: input, shape index: {}]
  %s7 = inlined_call_operand.hbm [shape: f32[1,128], index: 7, kind: input, shape index: {}]
  %s8 = inlined_call_operand.hbm [shape: f32[64,128], index: 8, kind: output, shape index: {}]
  %s9 = sld [smem:[#allocation0]]
  $region70: #{tpu_custom_call.1} parent=0
    _
  %s11 = ssub.s32 1, %s9
  %s12 = scalar_select 0, %s11, %s9
  %13 = sst [smem:[#allocation2]] %s0
  $region1: #{tpu_custom_call.1} parent=0
    #allocation3 [shape = 'u8[16384]{0}', space=vmem, size = 0x4000, scoped, tag = 'input window, operand 1, single buffered']
    #allocation4 [shape = 's32[1]{0}', space=sflag, size = 0x4, scoped, tag = 'scoped memory for tpu_custom_call.1']
    #allocation5 [shape = 's32[1]{0}', space=sflag, size = 0x4, scoped, tag = 'scoped memory for tpu_custom_call.1']
    #allocation6 [shape = 'u8[32768]{0}', space=vmem, size = 0x8000, scoped, tag = 'input window, operand 2, single buffered']
    #allocation7 [shape = 's32[1]{0}', space=sflag, size = 0x4, scoped, tag = 'scoped memory for tpu_custom_call.1']
    #allocation8 [shape = 'u8[512]{0}', space=vmem, size = 0x400, scoped, tag = 'input window, operand 3, single buffered']
    #allocation9 [shape = 'u8[32768]{0}', space=vmem, size = 0x8000, scoped, tag = 'input window, operand 4, single buffered']
    #allocation10 [shape = 's32[1]{0}', space=sflag, size = 0x4, scoped, tag = 'scoped memory for tpu_custom_call.1']
    #allocation11 [shape = 'u8[512]{0}', space=vmem, size = 0x400, scoped, tag = 'input window, operand 5, single buffered']
    #allocation12 [shape = 'u8[32768]{0}', space=vmem, size = 0x8000, scoped, tag = 'input window, operand 6, single buffered']
    #allocation13 [shape = 's32[1]{0}', space=sflag, size = 0x4, scoped, tag = 'scoped memory for tpu_custom_call.1']
    #allocation14 [shape = 'u8[512]{0}', space=vmem, size = 0x400, scoped, tag = 'input window, operand 7, single buffered']
    #allocation15 [shape = 'u8[32768]{0}', space=vmem, size = 0x8000, scoped, tag = 'output window, operand 0, single buffered']
    %14 = vsyncpa [#allocation4], 0
    %15 = vsyncpa [#allocation7], 0
    %16 = vsyncpa [#allocation10], 0
    %17 = vsyncpa [#allocation13], 0
    %18 = vsyncpa [#allocation5], 0
    // Predicated region
    $region2: #{tpu_custom_call.1} parent=1 // pred_check
      _
    $region3: #{tpu_custom_call.1} parent=1 // pred_check_branch
      %20 = sbr.rel (0) target = $region5
    $region4: #{tpu_custom_call.1} parent=1 // pred_region
      _
    $region5: #{tpu_custom_call.1} parent=1 // pred_fallthru
      _
    // Predicated region
    $region6: #{tpu_custom_call.1} parent=1 // pred_check
      _
    $region7: #{tpu_custom_call.1} parent=1 // pred_check_branch
      %22 = sbr.rel (0) target = $region9
    $region8: #{tpu_custom_call.1} parent=1 // pred_region
      %s24 = ssub.s32 512, 512
      %25 = vsyncadd [#allocation4], %s24
      %s26 = sshll.u32 [#allocation3], 4
      %s27 = int_to_ptr.vmem [resolvable:$true] %s26
      %32 = dma.hbm_to_vmem [thread:$0]  %s1, 512, %s27, [#allocation4], 64, 64, 4
    $region9: #{tpu_custom_call.1} parent=1 // pred_fallthru
      _
    // Predicated region
    $region10: #{tpu_custom_call.1} parent=1 // pred_check
      _
    $region11: #{tpu_custom_call.1} parent=1 // pred_check_branch
      %34 = sbr.rel (0) target = $region13
    $region12: #{tpu_custom_call.1} parent=1 // pred_region
      %s36 = ssub.s32 1024, 1024
      %37 = vsyncadd [#allocation7], %s36
      %s38 = sshll.u32 [#allocation6], 4
      %s39 = int_to_ptr.vmem [resolvable:$true] %s38
      %44 = dma.hbm_to_vmem [thread:$0]  %s2, 1024, %s39, [#allocation7], 64, 64, 4
    $region13: #{tpu_custom_call.1} parent=1 // pred_fallthru
      _
    // Predicated region
    $region14: #{tpu_custom_call.1} parent=1 // pred_check
      _
    $region15: #{tpu_custom_call.1} parent=1 // pred_check_branch
      %46 = sbr.rel (0) target = $region17
    $region16: #{tpu_custom_call.1} parent=1 // pred_region
      %s48 = ssub.s32 16, 16
      %49 = vsyncadd [#allocation7], %s48
      %s51 = sshll.u32 [#allocation8], 4
      %s52 = int_to_ptr.vmem [resolvable:$true] %s51
      %54 = dma.hbm_to_vmem [thread:$0]  %s3, 16, %s52, [#allocation7]
    $region17: #{tpu_custom_call.1} parent=1 // pred_fallthru
      _
    // Predicated region
    $region18: #{tpu_custom_call.1} parent=1 // pred_check
      _
    $region19: #{tpu_custom_call.1} parent=1 // pred_check_branch
      %56 = sbr.rel (0) target = $region21
    $region20: #{tpu_custom_call.1} parent=1 // pred_region
      %s58 = ssub.s32 1024, 1024
      %59 = vsyncadd [#allocation10], %s58
      %s60 = sshll.u32 [#allocation9], 4
      %s61 = int_to_ptr.vmem [resolvable:$true] %s60
      %66 = dma.hbm_to_vmem [thread:$0]  %s4, 1024, %s61, [#allocation10], 64, 64, 4
    $region21: #{tpu_custom_call.1} parent=1 // pred_fallthru
      _
    // Predicated region
    $region22: #{tpu_custom_call.1} parent=1 // pred_check
      _
    $region23: #{tpu_custom_call.1} parent=1 // pred_check_branch
      %68 = sbr.rel (0) target = $region25
    $region24: #{tpu_custom_call.1} parent=1 // pred_region
      %s70 = ssub.s32 16, 16
      %71 = vsyncadd [#allocation10], %s70
      %s73 = sshll.u32 [#allocation11], 4
      %s74 = int_to_ptr.vmem [resolvable:$true] %s73
      %76 = dma.hbm_to_vmem [thread:$0]  %s5, 16, %s74, [#allocation10]
    $region25: #{tpu_custom_call.1} parent=1 // pred_fallthru
      _
    // Predicated region
    $region26: #{tpu_custom_call.1} parent=1 // pred_check
      _
    $region27: #{tpu_custom_call.1} parent=1 // pred_check_branch
      %78 = sbr.rel (0) target = $region29
    $region28: #{tpu_custom_call.1} parent=1 // pred_region
      %s80 = ssub.s32 1024, 1024
      %81 = vsyncadd [#allocation13], %s80
      %s82 = sshll.u32 [#allocation12], 4
      %s83 = int_to_ptr.vmem [resolvable:$true] %s82
      %88 = dma.hbm_to_vmem [thread:$0]  %s6, 1024, %s83, [#allocation13], 64, 64, 4
    $region29: #{tpu_custom_call.1} parent=1 // pred_fallthru
      _
    // Predicated region
    $region30: #{tpu_custom_call.1} parent=1 // pred_check
      _
    $region31: #{tpu_custom_call.1} parent=1 // pred_check_branch
      %90 = sbr.rel (0) target = $region33
    $region32: #{tpu_custom_call.1} parent=1 // pred_region
      %s92 = ssub.s32 16, 16
      %93 = vsyncadd [#allocation13], %s92
      %s95 = sshll.u32 [#allocation14], 4
      %s96 = int_to_ptr.vmem [resolvable:$true] %s95
      %98 = dma.hbm_to_vmem [thread:$0]  %s7, 16, %s96, [#allocation13]
    $region33: #{tpu_custom_call.1} parent=1 // pred_fallthru
      _
    // Predicated region
    $region34: #{tpu_custom_call.1} parent=1 // pred_check
      _
    $region35: #{tpu_custom_call.1} parent=1 // pred_check_branch
      %100 = sbr.rel (0) target = $region37
    $region36: #{tpu_custom_call.1} parent=1 // pred_region
      %101 = dma.done [#allocation4], 512
    $region37: #{tpu_custom_call.1} parent=1 // pred_fallthru
      _
    // Predicated region
    $region38: #{tpu_custom_call.1} parent=1 // pred_check
      _
    $region39: #{tpu_custom_call.1} parent=1 // pred_check_branch
      %103 = sbr.rel (0) target = $region41
    $region40: #{tpu_custom_call.1} parent=1 // pred_region
      %104 = dma.done [#allocation7], 1024
    $region41: #{tpu_custom_call.1} parent=1 // pred_fallthru
      _
    // Predicated region
    $region42: #{tpu_custom_call.1} parent=1 // pred_check
      _
    $region43: #{tpu_custom_call.1} parent=1 // pred_check_branch
      %106 = sbr.rel (0) target = $region45
    $region44: #{tpu_custom_call.1} parent=1 // pred_region
      %107 = dma.done [#allocation7], 16
    $region45: #{tpu_custom_call.1} parent=1 // pred_fallthru
      _
    // Predicated region
    $region46: #{tpu_custom_call.1} parent=1 // pred_check
      _
    $region47: #{tpu_custom_call.1} parent=1 // pred_check_branch
      %109 = sbr.rel (0) target = $region49
    $region48: #{tpu_custom_call.1} parent=1 // pred_region
      %110 = dma.done [#allocation10], 1024
    $region49: #{tpu_custom_call.1} parent=1 // pred_fallthru
      _
    // Predicated region
    $region50: #{tpu_custom_call.1} parent=1 // pred_check
      _
    $region51: #{tpu_custom_call.1} parent=1 // pred_check_branch
      %112 = sbr.rel (0) target = $region53
    $region52: #{tpu_custom_call.1} parent=1 // pred_region
      %113 = dma.done [#allocation10], 16
    $region53: #{tpu_custom_call.1} parent=1 // pred_fallthru
      _
    // Predicated region
    $region54: #{tpu_custom_call.1} parent=1 // pred_check
      _
    $region55: #{tpu_custom_call.1} parent=1 // pred_check_branch
      %115 = sbr.rel (0) target = $region57
    $region56: #{tpu_custom_call.1} parent=1 // pred_region
      %116 = dma.done [#allocation13], 1024
    $region57: #{tpu_custom_call.1} parent=1 // pred_fallthru
      _
    // Predicated region
    $region58: #{tpu_custom_call.1} parent=1 // pred_check
      _
    $region59: #{tpu_custom_call.1} parent=1 // pred_check_branch
      %118 = sbr.rel (0) target = $region61
    $region60: #{tpu_custom_call.1} parent=1 // pred_region
      %119 = dma.done [#allocation13], 16
    $region61: #{tpu_custom_call.1} parent=1 // pred_fallthru
      _
    %s121 = sld [smem:[#allocation2]]
    %v122 = vld [vmem:[#allocation3] sm:$0xf]
    %v123 = vld [vmem:[#allocation3 + $0x4] sm:$0xf]
    %v124 = vld [vmem:[#allocation3 + $0x8] sm:$0xf]
    %v125 = vld [vmem:[#allocation3 + $0xc] sm:$0xf]
    %v126 = vld [vmem:[#allocation3 + $0x10] sm:$0xf]
    %v127 = vld [vmem:[#allocation3 + $0x14] sm:$0xf]
    %v128 = vld [vmem:[#allocation3 + $0x18] sm:$0xf]
    %v129 = vld [vmem:[#allocation3 + $0x1c] sm:$0xf]
    %v130 = vld [vmem:[#allocation6] sm:$0xf]
    %v131 = vld [vmem:[#allocation6 + $0x4] sm:$0xf]
    %v132 = vld [vmem:[#allocation6 + $0x8] sm:$0xf]
    %v133 = vld [vmem:[#allocation6 + $0xc] sm:$0xf]
    %v134 = vld [vmem:[#allocation6 + $0x10] sm:$0xf]
    %v135 = vld [vmem:[#allocation6 + $0x14] sm:$0xf]
    %v136 = vld [vmem:[#allocation6 + $0x18] sm:$0xf]
    %v137 = vld [vmem:[#allocation6 + $0x1c] sm:$0xf]
    %v138 = vld [vmem:[#allocation6 + $0x20] sm:$0xf]
    %v139 = vld [vmem:[#allocation6 + $0x24] sm:$0xf]
    %v140 = vld [vmem:[#allocation6 + $0x28] sm:$0xf]
    %v141 = vld [vmem:[#allocation6 + $0x2c] sm:$0xf]
    %v142 = vld [vmem:[#allocation6 + $0x30] sm:$0xf]
    %v143 = vld [vmem:[#allocation6 + $0x34] sm:$0xf]
    %v144 = vld [vmem:[#allocation6 + $0x38] sm:$0xf]
    %v145 = vld [vmem:[#allocation6 + $0x3c] sm:$0xf]
    %v146 = vld [vmem:[#allocation8] sm:$0x1]
    %v148 = vlaneseq
    %v149 = vshrl.u32 %v148, 7
    %v150 = vsub.s32 0, %v149
    %v151 = vrot.slane %v146, %v150
    %v161 = vunpack.c.l.b16 %v122
    %v162 = vunpack.c.l.b16 %v123
    %v163 = vunpack.c.l.b16 %v124
    %v164 = vunpack.c.l.b16 %v125
    %v165 = vunpack.c.l.b16 %v126
    %v166 = vunpack.c.l.b16 %v127
    %v167 = vunpack.c.l.b16 %v128
    %v168 = vunpack.c.l.b16 %v129
    %v169 = vpack.c.b16 %v162, %v161
    %v170 = vpack.c.b16 %v164, %v163
    %v171 = vpack.c.b16 %v166, %v165
    %v172 = vpack.c.b16 %v168, %v167
    %v193 = vunpack.c.l.b16 %v130
    %v194 = vunpack.c.l.b16 %v131
    %v195 = vunpack.c.l.b16 %v132
    %v196 = vunpack.c.l.b16 %v133
    %v197 = vunpack.c.l.b16 %v134
    %v198 = vunpack.c.l.b16 %v135
    %v199 = vunpack.c.l.b16 %v136
    %v200 = vunpack.c.l.b16 %v137
    %v201 = vunpack.c.l.b16 %v138
    %v202 = vunpack.c.l.b16 %v139
    %v203 = vunpack.c.l.b16 %v140
    %v204 = vunpack.c.l.b16 %v141
    %v205 = vunpack.c.l.b16 %v142
    %v206 = vunpack.c.l.b16 %v143
    %v207 = vunpack.c.l.b16 %v144
    %v208 = vunpack.c.l.b16 %v145
    %v209 = vpack.c.b16 %v194, %v193
    %v210 = vpack.c.b16 %v196, %v195
    %v211 = vpack.c.b16 %v198, %v197
    %v212 = vpack.c.b16 %v200, %v199
    %v213 = vpack.c.b16 %v202, %v201
    %v214 = vpack.c.b16 %v204, %v203
    %v215 = vpack.c.b16 %v206, %v205
    %v216 = vpack.c.b16 %v208, %v207
    %225 = vmatprep.subr.bf16.mxu0 0
    %226 = vmatpush1.bf16.msra.mxu0 %v209
    %227 = vmatprep.subr.bf16.mxu0 0
    %228 = vmatpush1.bf16.msra.mxu0 %v210
    %229 = vmatprep.subr.bf16.mxu0 0
    %230 = vmatpush1.bf16.msra.mxu0 %v211
    %231 = vmatprep.subr.bf16.mxu0 0
    %232 = vmatpush1.bf16.msra.mxu0 %v212
    %233 = vmatprep.subr.bf16.mxu0 0
    %234 = vmatpush1.bf16.msra.mxu0 %v213
    %235 = vmatprep.subr.bf16.mxu0 0
    %236 = vmatpush1.bf16.msra.mxu0 %v214
    %237 = vmatprep.subr.bf16.mxu0 0
    %238 = vmatpush1.bf16.msra.mxu0 %v215
    %239 = vmatprep.subr.bf16.mxu0 0
    %240 = vmatpush1.bf16.msra.mxu0 %v216
    %241 = vmatprep.subr.bf16.mxu0 0
    %242 = vmatpush1.bf16.msra.mxu0 0
    %243 = vmatprep.subr.bf16.mxu0 0
    %244 = vmatpush1.bf16.msra.mxu0 0
    %245 = vmatprep.subr.bf16.mxu0 0
    %246 = vmatpush1.bf16.msra.mxu0 0
    %247 = vmatprep.subr.bf16.mxu0 0
    %248 = vmatpush1.bf16.msra.mxu0 0
    %249 = vmatprep.subr.bf16.mxu0 0
    %250 = vmatpush1.bf16.msra.mxu0 0
    %251 = vmatprep.subr.bf16.mxu0 0
    %252 = vmatpush1.bf16.msra.mxu0 0
    %253 = vmatprep.subr.bf16.mxu0 0
    %254 = vmatpush1.bf16.msra.mxu0 0
    %255 = vmatprep.subr.bf16.mxu0 0
    %256 = vmatpush1.bf16.msra.mxu0 0
    %257 = vmatprep.mubr.bf16.mxu0 0
    %258 = vmatmul.mubr.bf16.gmra.mrb[0].mxu0 %v169
    %v259 = vpop.f32.mrb[0].mxu0
    %v260 = vadd.f32 %v151, %v259
    %v261 = vpop.f32.mrb[0].mxu0
    %v262 = vpop.f32.mrb[0].mxu0
    %v263 = vadd.f32 %v151, %v262
    %v264 = vpop.f32.mrb[0].mxu0
    %265 = vmatprep.mubr.bf16.mxu0 0
    %266 = vmatmul.mubr.bf16.gmra.mrb[0].mxu0 %v170
    %v267 = vpop.f32.mrb[0].mxu0
    %v268 = vadd.f32 %v151, %v267
    %v269 = vpop.f32.mrb[0].mxu0
    %v270 = vpop.f32.mrb[0].mxu0
    %v271 = vadd.f32 %v151, %v270
    %v272 = vpop.f32.mrb[0].mxu0
    %273 = vmatprep.mubr.bf16.mxu0 0
    %274 = vmatmul.mubr.bf16.gmra.mrb[0].mxu0 %v171
    %v275 = vpop.f32.mrb[0].mxu0
    %v276 = vadd.f32 %v151, %v275
    %v277 = vpop.f32.mrb[0].mxu0
    %v278 = vpop.f32.mrb[0].mxu0
    %v279 = vadd.f32 %v151, %v278
    %v280 = vpop.f32.mrb[0].mxu0
    %281 = vmatprep.mubr.bf16.mxu0 0
    %282 = vmatmul.mubr.bf16.gmra.mrb[0].mxu0 %v172
    %v283 = vpop.f32.mrb[0].mxu0
    %v284 = vadd.f32 %v151, %v283
    %v285 = vpop.f32.mrb[0].mxu0
    %v286 = vpop.f32.mrb[0].mxu0
    %v287 = vadd.f32 %v151, %v286
    %v288 = vpop.f32.mrb[0].mxu0
    %289 = vdwg.mxu0
    %vm290 = vcmp.ge.f32.partialorder %v260, 0.0
    %vm291 = vcmp.ge.f32.partialorder %v263, 0.0
    %vm292 = vcmp.ge.f32.partialorder %v268, 0.0
    %vm293 = vcmp.ge.f32.partialorder %v271, 0.0
    %vm294 = vcmp.ge.f32.partialorder %v276, 0.0
    %vm295 = vcmp.ge.f32.partialorder %v279, 0.0
    %vm296 = vcmp.ge.f32.partialorder %v284, 0.0
    %vm297 = vcmp.ge.f32.partialorder %v287, 0.0
    %v298 = vstv %s121
    %v299 = vmul.f32 %v298, %v260
    %v300 = vmul.f32 %v298, %v263
    %v301 = vmul.f32 %v298, %v268
    %v302 = vmul.f32 %v298, %v271
    %v303 = vmul.f32 %v298, %v276
    %v304 = vmul.f32 %v298, %v279
    %v305 = vmul.f32 %v298, %v284
    %v306 = vmul.f32 %v298, %v287
    %v307 = vsel %vm290, %v260, %v299
    %v308 = vsel %vm291, %v263, %v300
    %v309 = vsel %vm292, %v268, %v301
    %v310 = vsel %vm293, %v271, %v302
    %v311 = vsel %vm294, %v276, %v303
    %v312 = vsel %vm295, %v279, %v304
    %v313 = vsel %vm296, %v284, %v305
    %v314 = vsel %vm297, %v287, %v306
    %v315 = vpack.c.bf16 %v308, %v307
    %v316 = vpack.c.bf16 %v310, %v309
    %v317 = vpack.c.bf16 %v312, %v311
    %v318 = vpack.c.bf16 %v314, %v313
    %v319 = vld [vmem:[#allocation9] sm:$0xf]
    %v320 = vld [vmem:[#allocation9 + $0x4] sm:$0xf]
    %v321 = vld [vmem:[#allocation9 + $0x8] sm:$0xf]
    %v322 = vld [vmem:[#allocation9 + $0xc] sm:$0xf]
    %v323 = vld [vmem:[#allocation9 + $0x10] sm:$0xf]
    %v324 = vld [vmem:[#allocation9 + $0x14] sm:$0xf]
    %v325 = vld [vmem:[#allocation9 + $0x18] sm:$0xf]
    %v326 = vld [vmem:[#allocation9 + $0x1c] sm:$0xf]
    %v327 = vld [vmem:[#allocation9 + $0x20] sm:$0xf]
    %v328 = vld [vmem:[#allocation9 + $0x24] sm:$0xf]
    %v329 = vld [vmem:[#allocation9 + $0x28] sm:$0xf]
    %v330 = vld [vmem:[#allocation9 + $0x2c] sm:$0xf]
    %v331 = vld [vmem:[#allocation9 + $0x30] sm:$0xf]
    %v332 = vld [vmem:[#allocation9 + $0x34] sm:$0xf]
    %v333 = vld [vmem:[#allocation9 + $0x38] sm:$0xf]
    %v334 = vld [vmem:[#allocation9 + $0x3c] sm:$0xf]
    %v335 = vld [vmem:[#allocation11] sm:$0x1]
    %v337 = vlaneseq
    %v338 = vshrl.u32 %v337, 7
    %v339 = vsub.s32 0, %v338
    %v340 = vrot.slane %v335, %v339
    %v358 = vunpack.c.l.b16 %v319
    %v359 = vunpack.c.l.b16 %v320
    %v360 = vunpack.c.l.b16 %v321
    %v361 = vunpack.c.l.b16 %v322
    %v362 = vunpack.c.l.b16 %v323
    %v363 = vunpack.c.l.b16 %v324
    %v364 = vunpack.c.l.b16 %v325
    %v365 = vunpack.c.l.b16 %v326
    %v366 = vunpack.c.l.b16 %v327
    %v367 = vunpack.c.l.b16 %v328
    %v368 = vunpack.c.l.b16 %v329
    %v369 = vunpack.c.l.b16 %v330
    %v370 = vunpack.c.l.b16 %v331
    %v371 = vunpack.c.l.b16 %v332
    %v372 = vunpack.c.l.b16 %v333
    %v373 = vunpack.c.l.b16 %v334
    %v374 = vpack.c.b16 %v359, %v358
    %v375 = vpack.c.b16 %v361, %v360
    %v376 = vpack.c.b16 %v363, %v362
    %v377 = vpack.c.b16 %v365, %v364
    %v378 = vpack.c.b16 %v367, %v366
    %v379 = vpack.c.b16 %v369, %v368
    %v380 = vpack.c.b16 %v371, %v370
    %v381 = vpack.c.b16 %v373, %v372
    %390 = vmatprep.subr.bf16.mxu0 0
    %391 = vmatpush1.bf16.msra.mxu0 %v374
    %392 = vmatprep.subr.bf16.mxu0 0
    %393 = vmatpush1.bf16.msra.mxu0 %v375
    %394 = vmatprep.subr.bf16.mxu0 0
    %395 = vmatpush1.bf16.msra.mxu0 %v376
    %396 = vmatprep.subr.bf16.mxu0 0
    %397 = vmatpush1.bf16.msra.mxu0 %v377
    %398 = vmatprep.subr.bf16.mxu0 0
    %399 = vmatpush1.bf16.msra.mxu0 %v378
    %400 = vmatprep.subr.bf16.mxu0 0
    %401 = vmatpush1.bf16.msra.mxu0 %v379
    %402 = vmatprep.subr.bf16.mxu0 0
    %403 = vmatpush1.bf16.msra.mxu0 %v380
    %404 = vmatprep.subr.bf16.mxu0 0
    %405 = vmatpush1.bf16.msra.mxu0 %v381
    %406 = vmatprep.subr.bf16.mxu0 0
    %407 = vmatpush1.bf16.msra.mxu0 0
    %408 = vmatprep.subr.bf16.mxu0 0
    %409 = vmatpush1.bf16.msra.mxu0 0
    %410 = vmatprep.subr.bf16.mxu0 0
    %411 = vmatpush1.bf16.msra.mxu0 0
    %412 = vmatprep.subr.bf16.mxu0 0
    %413 = vmatpush1.bf16.msra.mxu0 0
    %414 = vmatprep.subr.bf16.mxu0 0
    %415 = vmatpush1.bf16.msra.mxu0 0
    %416 = vmatprep.subr.bf16.mxu0 0
    %417 = vmatpush1.bf16.msra.mxu0 0
    %418 = vmatprep.subr.bf16.mxu0 0
    %419 = vmatpush1.bf16.msra.mxu0 0
    %420 = vmatprep.subr.bf16.mxu0 0
    %421 = vmatpush1.bf16.msra.mxu0 0
    %422 = vmatprep.mubr.bf16.mxu0 0
    %423 = vmatmul.mubr.bf16.gmra.mrb[0].mxu0 %v315
    %v424 = vpop.f32.mrb[0].mxu0
    %v425 = vadd.f32 %v340, %v424
    %v426 = vpop.f32.mrb[0].mxu0
    %v427 = vpop.f32.mrb[0].mxu0
    %v428 = vadd.f32 %v340, %v427
    %v429 = vpop.f32.mrb[0].mxu0
    %430 = vmatprep.mubr.bf16.mxu0 0
    %431 = vmatmul.mubr.bf16.gmra.mrb[0].mxu0 %v316
    %v432 = vpop.f32.mrb[0].mxu0
    %v433 = vadd.f32 %v340, %v432
    %v434 = vpop.f32.mrb[0].mxu0
    %v435 = vpop.f32.mrb[0].mxu0
    %v436 = vadd.f32 %v340, %v435
    %v437 = vpop.f32.mrb[0].mxu0
    %438 = vmatprep.mubr.bf16.mxu0 0
    %439 = vmatmul.mubr.bf16.gmra.mrb[0].mxu0 %v317
    %v440 = vpop.f32.mrb[0].mxu0
    %v441 = vadd.f32 %v340, %v440
    %v442 = vpop.f32.mrb[0].mxu0
    %v443 = vpop.f32.mrb[0].mxu0
    %v444 = vadd.f32 %v340, %v443
    %v445 = vpop.f32.mrb[0].mxu0
    %446 = vmatprep.mubr.bf16.mxu0 0
    %447 = vmatmul.mubr.bf16.gmra.mrb[0].mxu0 %v318
    %v448 = vpop.f32.mrb[0].mxu0
    %v449 = vadd.f32 %v340, %v448
    %v450 = vpop.f32.mrb[0].mxu0
    %v451 = vpop.f32.mrb[0].mxu0
    %v452 = vadd.f32 %v340, %v451
    %v453 = vpop.f32.mrb[0].mxu0
    %454 = vdwg.mxu0
    %vm455 = vcmp.ge.f32.partialorder %v425, 0.0
    %vm456 = vcmp.ge.f32.partialorder %v428, 0.0
    %vm457 = vcmp.ge.f32.partialorder %v433, 0.0
    %vm458 = vcmp.ge.f32.partialorder %v436, 0.0
    %vm459 = vcmp.ge.f32.partialorder %v441, 0.0
    %vm460 = vcmp.ge.f32.partialorder %v444, 0.0
    %vm461 = vcmp.ge.f32.partialorder %v449, 0.0
    %vm462 = vcmp.ge.f32.partialorder %v452, 0.0
    %v463 = vmul.f32 %v298, %v425
    %v464 = vmul.f32 %v298, %v428
    %v465 = vmul.f32 %v298, %v433
    %v466 = vmul.f32 %v298, %v436
    %v467 = vmul.f32 %v298, %v441
    %v468 = vmul.f32 %v298, %v444
    %v469 = vmul.f32 %v298, %v449
    %v470 = vmul.f32 %v298, %v452
    %v471 = vsel %vm455, %v425, %v463
    %v472 = vsel %vm456, %v428, %v464
    %v473 = vsel %vm457, %v433, %v465
    %v474 = vsel %vm458, %v436, %v466
    %v475 = vsel %vm459, %v441, %v467
    %v476 = vsel %vm460, %v444, %v468
    %v477 = vsel %vm461, %v449, %v469
    %v478 = vsel %vm462, %v452, %v470
    %v479 = vpack.c.bf16 %v472, %v471
    %v480 = vpack.c.bf16 %v474, %v473
    %v481 = vpack.c.bf16 %v476, %v475
    %v482 = vpack.c.bf16 %v478, %v477
    %v483 = vld [vmem:[#allocation12] sm:$0xf]
    %v484 = vld [vmem:[#allocation12 + $0x4] sm:$0xf]
    %v485 = vld [vmem:[#allocation12 + $0x8] sm:$0xf]
    %v486 = vld [vmem:[#allocation12 + $0xc] sm:$0xf]
    %v487 = vld [vmem:[#allocation12 + $0x10] sm:$0xf]
    %v488 = vld [vmem:[#allocation12 + $0x14] sm:$0xf]
    %v489 = vld [vmem:[#allocation12 + $0x18] sm:$0xf]
    %v490 = vld [vmem:[#allocation12 + $0x1c] sm:$0xf]
    %v491 = vld [vmem:[#allocation12 + $0x20] sm:$0xf]
    %v492 = vld [vmem:[#allocation12 + $0x24] sm:$0xf]
    %v493 = vld [vmem:[#allocation12 + $0x28] sm:$0xf]
    %v494 = vld [vmem:[#allocation12 + $0x2c] sm:$0xf]
    %v495 = vld [vmem:[#allocation12 + $0x30] sm:$0xf]
    %v496 = vld [vmem:[#allocation12 + $0x34] sm:$0xf]
    %v497 = vld [vmem:[#allocation12 + $0x38] sm:$0xf]
    %v498 = vld [vmem:[#allocation12 + $0x3c] sm:$0xf]
    %v499 = vld [vmem:[#allocation14] sm:$0x1]
    %v501 = vlaneseq
    %v502 = vshrl.u32 %v501, 7
    %v503 = vsub.s32 0, %v502
    %v504 = vrot.slane %v499, %v503
    %v522 = vunpack.c.l.b16 %v483
    %v523 = vunpack.c.l.b16 %v484
    %v524 = vunpack.c.l.b16 %v485
    %v525 = vunpack.c.l.b16 %v486
    %v526 = vunpack.c.l.b16 %v487
    %v527 = vunpack.c.l.b16 %v488
    %v528 = vunpack.c.l.b16 %v489
    %v529 = vunpack.c.l.b16 %v490
    %v530 = vunpack.c.l.b16 %v491
    %v531 = vunpack.c.l.b16 %v492
    %v532 = vunpack.c.l.b16 %v493
    %v533 = vunpack.c.l.b16 %v494
    %v534 = vunpack.c.l.b16 %v495
    %v535 = vunpack.c.l.b16 %v496
    %v536 = vunpack.c.l.b16 %v497
    %v537 = vunpack.c.l.b16 %v498
    %v538 = vpack.c.b16 %v523, %v522
    %v539 = vpack.c.b16 %v525, %v524
    %v540 = vpack.c.b16 %v527, %v526
    %v541 = vpack.c.b16 %v529, %v528
    %v542 = vpack.c.b16 %v531, %v530
    %v543 = vpack.c.b16 %v533, %v532
    %v544 = vpack.c.b16 %v535, %v534
    %v545 = vpack.c.b16 %v537, %v536
    %554 = vmatprep.subr.bf16.mxu0 0
    %555 = vmatpush1.bf16.msra.mxu0 %v538
    %556 = vmatprep.subr.bf16.mxu0 0
    %557 = vmatpush1.bf16.msra.mxu0 %v539
    %558 = vmatprep.subr.bf16.mxu0 0
    %559 = vmatpush1.bf16.msra.mxu0 %v540
    %560 = vmatprep.subr.bf16.mxu0 0
    %561 = vmatpush1.bf16.msra.mxu0 %v541
    %562 = vmatprep.subr.bf16.mxu0 0
    %563 = vmatpush1.bf16.msra.mxu0 %v542
    %564 = vmatprep.subr.bf16.mxu0 0
    %565 = vmatpush1.bf16.msra.mxu0 %v543
    %566 = vmatprep.subr.bf16.mxu0 0
    %567 = vmatpush1.bf16.msra.mxu0 %v544
    %568 = vmatprep.subr.bf16.mxu0 0
    %569 = vmatpush1.bf16.msra.mxu0 %v545
    %570 = vmatprep.subr.bf16.mxu0 0
    %571 = vmatpush1.bf16.msra.mxu0 0
    %572 = vmatprep.subr.bf16.mxu0 0
    %573 = vmatpush1.bf16.msra.mxu0 0
    %574 = vmatprep.subr.bf16.mxu0 0
    %575 = vmatpush1.bf16.msra.mxu0 0
    %576 = vmatprep.subr.bf16.mxu0 0
    %577 = vmatpush1.bf16.msra.mxu0 0
    %578 = vmatprep.subr.bf16.mxu0 0
    %579 = vmatpush1.bf16.msra.mxu0 0
    %580 = vmatprep.subr.bf16.mxu0 0
    %581 = vmatpush1.bf16.msra.mxu0 0
    %582 = vmatprep.subr.bf16.mxu0 0
    %583 = vmatpush1.bf16.msra.mxu0 0
    %584 = vmatprep.subr.bf16.mxu0 0
    %585 = vmatpush1.bf16.msra.mxu0 0
    %586 = vmatprep.mubr.bf16.mxu0 0
    %587 = vmatmul.mubr.bf16.gmra.mrb[0].mxu0 %v479
    %v588 = vpop.f32.mrb[0].mxu0
    %v589 = vadd.f32 %v504, %v588
    %v590 = vpop.f32.mrb[0].mxu0
    %v591 = vpop.f32.mrb[0].mxu0
    %v592 = vadd.f32 %v504, %v591
    %v593 = vpop.f32.mrb[0].mxu0
    %594 = vmatprep.mubr.bf16.mxu0 0
    %595 = vmatmul.mubr.bf16.gmra.mrb[0].mxu0 %v480
    %v596 = vpop.f32.mrb[0].mxu0
    %v597 = vadd.f32 %v504, %v596
    %v598 = vpop.f32.mrb[0].mxu0
    %v599 = vpop.f32.mrb[0].mxu0
    %v600 = vadd.f32 %v504, %v599
    %v601 = vpop.f32.mrb[0].mxu0
    %602 = vmatprep.mubr.bf16.mxu0 0
    %603 = vmatmul.mubr.bf16.gmra.mrb[0].mxu0 %v481
    %v604 = vpop.f32.mrb[0].mxu0
    %v605 = vadd.f32 %v504, %v604
    %v606 = vpop.f32.mrb[0].mxu0
    %v607 = vpop.f32.mrb[0].mxu0
    %v608 = vadd.f32 %v504, %v607
    %v609 = vpop.f32.mrb[0].mxu0
    %610 = vmatprep.mubr.bf16.mxu0 0
    %611 = vmatmul.mubr.bf16.gmra.mrb[0].mxu0 %v482
    %v612 = vpop.f32.mrb[0].mxu0
    %v613 = vadd.f32 %v504, %v612
    %v614 = vpop.f32.mrb[0].mxu0
    %v615 = vpop.f32.mrb[0].mxu0
    %v616 = vadd.f32 %v504, %v615
    %v617 = vpop.f32.mrb[0].mxu0
    %618 = vdwg.mxu0
    %619 = vst [vmem:[#allocation15] sm:$0xff] %v589
    %620 = vst [vmem:[#allocation15 + $0x8] sm:$0xff] %v592
    %621 = vst [vmem:[#allocation15 + $0x10] sm:$0xff] %v597
    %622 = vst [vmem:[#allocation15 + $0x18] sm:$0xff] %v600
    %623 = vst [vmem:[#allocation15 + $0x20] sm:$0xff] %v605
    %624 = vst [vmem:[#allocation15 + $0x28] sm:$0xff] %v608
    %625 = vst [vmem:[#allocation15 + $0x30] sm:$0xff] %v613
    %626 = vst [vmem:[#allocation15 + $0x38] sm:$0xff] %v616
    // Predicated region
    $region62: #{tpu_custom_call.1} parent=1 // pred_check
      _
    $region63: #{tpu_custom_call.1} parent=1 // pred_check_branch
      %628 = sbr.rel (0) target = $region65
    $region64: #{tpu_custom_call.1} parent=1 // pred_region
      %s630 = ssub.s32 1024, 1024
      %631 = vsyncadd [#allocation5], %s630
      %s632 = sshll.u32 [#allocation15], 4
      %s633 = int_to_ptr.vmem [resolvable:$true] %s632
      %638 = dma.vmem_to_hbm [thread:$0]  %s633, 1024, %s8, [#allocation5], 128, 128, 8
    $region65: #{tpu_custom_call.1} parent=1 // pred_fallthru
      _
    // Predicated region
    $region66: #{tpu_custom_call.1} parent=1 // pred_check
      _
    $region67: #{tpu_custom_call.1} parent=1 // pred_check_branch
      %640 = sbr.rel (0) target = $region69
    $region68: #{tpu_custom_call.1} parent=1 // pred_region
      %641 = dma.done [#allocation5], 1024
    $region69: #{tpu_custom_call.1} parent=1 // pred_fallthru
      _
    %642 = vsyncpa [#allocation4], 1
    %643 = vsyncpa [#allocation7], 1
    %644 = vsyncpa [#allocation10], 1
    %645 = vsyncpa [#allocation13], 1
    %646 = vsyncpa [#allocation5], 1

</llo_original>
